<compile_context>
chip_gen: v7x
topology: tpu7x:2x2x1
jax: 0.10.0
libtpu: 0.0.40
codegen_flags: <defaults>
</compile_context>

<pallas_src>
import functools

import jax
import jax.numpy as jnp
from jax import lax
from jax.experimental import pallas as pl
from jax.experimental.pallas import tpu as pltpu


# ----------------------------------------------------------------------------
# Pallas kernel
# ----------------------------------------------------------------------------
def _nll_loss_kernel(pred_ref, tgt_ref, loss_ref, *, n_rows, inv_n):
    """Accumulate -sum_i pred[i, target[i]] over one tile of rows.

    pred_ref : [tb, C]  f32 log-probabilities
    tgt_ref  : [tb, 1]  int32 class indices
    loss_ref : [1, 1]   f32 accumulator / final mean loss
    """
    i = pl.program_id(0)

    @pl.when(i == 0)
    def _init():
        loss_ref[...] = jnp.zeros_like(loss_ref)

    tb, n_cls = pred_ref.shape
    pred = pred_ref[...]                                        # [tb, C]
    tgt = tgt_ref[...]                                          # [tb, 1]

    class_ids = lax.broadcasted_iota(jnp.int32, (tb, n_cls), 1)  # lane iota
    onehot = class_ids == tgt                                    # [tb, C] bool

    # Mask rows of a ragged final tile (when B % tb != 0).
    row_ids = i * tb + lax.broadcasted_iota(jnp.int32, (tb, 1), 0)
    valid = row_ids < n_rows                                     # [tb, 1] bool

    picked = jnp.where(onehot & valid, pred, 0.0)                # [tb, C]
    loss_ref[...] = loss_ref[...] + (-jnp.sum(picked))

    @pl.when(i == pl.num_programs(0) - 1)
    def _finalize():
        loss_ref[...] = loss_ref[...] * inv_n                    # mean reduction


# ----------------------------------------------------------------------------
# Wrapper
# ----------------------------------------------------------------------------
def nll_loss(pred, target, trans_feat=None, *, tile_b=None):
    """pred: [B, C] f32 log-probs, target: [B] int -> scalar f32 mean NLL loss."""
    del trans_feat  # unused by the reference get_loss
    B, C = pred.shape
    pred = pred.astype(jnp.float32)
    tgt2d = target.astype(jnp.int32).reshape(B, 1)

    if tile_b is None:
        # Single block when small; otherwise a few-hundred-row tile keeps the
        # VMEM footprint small (plenty of headroom even on v7x's 64 MiB VMEM).
        tile_b = B if B <= 1024 else 1024
    if tile_b != B and tile_b % 8 != 0:
        raise ValueError("tile_b must equal B or be a multiple of 8")
    grid = (pl.cdiv(B, tile_b),)

    kernel = functools.partial(_nll_loss_kernel, n_rows=B, inv_n=1.0 / B)

    # TODO(synk): F.nll_loss options ignore_index / per-class weight are not
    # implemented (the reference uses the defaults and valid class targets).
    loss = pl.pallas_call(
        kernel,
        out_shape=jax.ShapeDtypeStruct((1, 1), jnp.float32),
        grid=grid,
        in_specs=[
            pl.BlockSpec((tile_b, C), lambda i: (i, 0)),   # classes lane-dense
            pl.BlockSpec((tile_b, 1), lambda i: (i, 0)),
        ],
        out_specs=pl.BlockSpec((1, 1), lambda i: (0, 0)),  # resident accumulator
        compiler_params=pltpu.CompilerParams(
            dimension_semantics=("arbitrary",),            # reduction over batch tiles
            vmem_limit_bytes=32 * 1024 * 1024,
        ),
    )(pred, tgt2d)
    return loss[0, 0]


@functools.partial(jax.jit, static_argnames=("tile_b",))
def get_loss_forward(pred, target, trans_feat=None, tile_b=None):
    """Equivalent of get_loss.forward(pred, target, trans_feat)."""
    return nll_loss(pred, target, trans_feat, tile_b=tile_b)


# ----------------------------------------------------------------------------
if __name__ == "__main__":
    B, NUM_CLASS = 16, 40                                  # small shapes

    key = jax.random.PRNGKey(0)
    k_logits, k_tgt = jax.random.split(key)
    logits = jax.random.normal(k_logits, (B, NUM_CLASS), jnp.float32)
    pred = jax.nn.log_softmax(logits, axis=-1)             # model output = log-probs
    target = jax.random.randint(k_tgt, (B,), 0, NUM_CLASS, dtype=jnp.int32)
    trans_feat = None                                      # unused by get_loss

    # tile_b=8 -> grid of 2 steps, exercising init / accumulate / finalize.
    loss = get_loss_forward(pred, target, trans_feat, tile_b=8)
    jax.block_until_ready(loss)

    # Pure-JAX reference for a sanity check (F.nll_loss, mean reduction).
    ref = -jnp.mean(jnp.take_along_axis(pred, target[:, None], axis=1))

    assert loss.shape == ()
    assert bool(jnp.isfinite(loss))
    assert abs(float(loss) - float(ref)) < 1e-5, (float(loss), float(ref))
    print("KERNEL_OK")
</pallas_src>

<mosaic_0001>
module attributes {stable_mosaic.version = 11 : i64} {
  func.func @_nll_loss_kernel(%arg0: i32, %arg1: memref<8x40xf32, #tpu.memory_space<vmem>>, %arg2: memref<8x1xi32, #tpu.memory_space<vmem>>, %arg3: memref<1x1xf32, #tpu.memory_space<vmem>>) attributes {dimension_semantics = [#tpu.dimension_semantics<arbitrary>], iteration_bounds = array<i64: 2>, scalar_prefetch = 0 : i64, scratch_operands = 0 : i64, tpu.core_type = #tpu.core_type<tc>, window_params = [{transform_indices = @transform_0, window_bounds = array<i64: 8, 40>}, {transform_indices = @transform_1, window_bounds = array<i64: 8, 1>}, {pipeline_mode = #tpu.pipeline_mode<synchronous>, transform_indices = @transform_2, window_bounds = array<i64: 1, 1>}]} {
    %c0_i32 = arith.constant 0 : i32
    %0 = arith.cmpi eq, %arg0, %c0_i32 : i32
    %1 = arith.extui %0 : i1 to i32
    %c0_i32_0 = arith.constant 0 : i32
    %2 = arith.cmpi ne, %1, %c0_i32_0 : i32
    scf.if %2 {
      %cst_11 = arith.constant 0.000000e+00 : f32
      %30 = vector.broadcast %cst_11 : f32 to vector<1x1xf32>
      %c0_12 = arith.constant 0 : index
      %c0_13 = arith.constant 0 : index
      %31 = vector.load %arg3[%c0_12, %c0_13] : memref<1x1xf32, #tpu.memory_space<vmem>>, vector<1x1xf32>
      tpu.vector_store %arg3[%c0_12, %c0_13], %30 {strides = array<i32>} : memref<1x1xf32, #tpu.memory_space<vmem>>, vector<1x1xf32>,
    } else {
    }
    %c0 = arith.constant 0 : index
    %c0_1 = arith.constant 0 : index
    %3 = vector.load %arg1[%c0, %c0_1] : memref<8x40xf32, #tpu.memory_space<vmem>>, vector<8x40xf32>
    %c0_2 = arith.constant 0 : index
    %c0_3 = arith.constant 0 : index
    %4 = vector.load %arg2[%c0_2, %c0_3] : memref<8x1xi32, #tpu.memory_space<vmem>>, vector<8x1xi32>
    %5 = tpu.iota {dimensions = array<i32: 1>} : vector<8x40xi32>
    %6 = vector.broadcast %4 : vector<8x1xi32> to vector<8x40xi32>
    %7 = arith.cmpi eq, %5, %6 : vector<8x40xi32>
    %c8_i32 = arith.constant 8 : i32
    %8 = arith.muli %arg0, %c8_i32 : i32
    %9 = tpu.iota {dimensions = array<i32: 0>} : vector<8x1xi32>
    %10 = vector.broadcast %8 : i32 to vector<8x1xi32>
    %11 = arith.addi %10, %9 : vector<8x1xi32>
    %c16_i32 = arith.constant 16 : i32
    %12 = vector.broadcast %c16_i32 : i32 to vector<8x1xi32>
    %13 = arith.cmpi slt, %11, %12 : vector<8x1xi32>
    %14 = vector.broadcast %13 : vector<8x1xi1> to vector<8x40xi1>
    %15 = arith.andi %7, %14 : vector<8x40xi1>
    %cst = arith.constant 0.000000e+00 : f32
    %16 = vector.broadcast %cst : f32 to vector<8x40xf32>
    %17 = arith.select %15, %3, %16 : vector<8x40xi1>, vector<8x40xf32>
    %c0_4 = arith.constant 0 : index
    %c0_5 = arith.constant 0 : index
    %18 = vector.load %arg3[%c0_4, %c0_5] : memref<1x1xf32, #tpu.memory_space<vmem>>, vector<1x1xf32>
    %19 = vector.shape_cast %17 : vector<8x40xf32> to vector<1x8x40xf32>
    %cst_6 = arith.constant dense<0.000000e+00> : vector<1xf32>
    %20 = vector.multi_reduction <add>, %19, %cst_6 [1, 2] : vector<1x8x40xf32> to vector<1xf32>
    %21 = vector.shape_cast %20 : vector<1xf32> to vector<1x1x1xf32>
    %22 = vector.extract %21[0, 0, 0] : f32 from vector<1x1x1xf32>
    %cst_7 = arith.constant 0.000000e+00 : f32
    %23 = arith.subf %cst_7, %22 : f32
    %24 = vector.broadcast %23 : f32 to vector<1x1xf32>
    %25 = arith.addf %18, %24 : vector<1x1xf32>
    %c0_8 = arith.constant 0 : index
    %c0_9 = arith.constant 0 : index
    %26 = vector.load %arg3[%c0_8, %c0_9] : memref<1x1xf32, #tpu.memory_space<vmem>>, vector<1x1xf32>
    tpu.vector_store %arg3[%c0_8, %c0_9], %25 {strides = array<i32>} : memref<1x1xf32, #tpu.memory_space<vmem>>, vector<1x1xf32>,
    %c1_i32 = arith.constant 1 : i32
    %27 = arith.cmpi eq, %arg0, %c1_i32 : i32
    %28 = arith.extui %27 : i1 to i32
    %c0_i32_10 = arith.constant 0 : i32
    %29 = arith.cmpi ne, %28, %c0_i32_10 : i32
    scf.if %29 {
      %c0_11 = arith.constant 0 : index
      %c0_12 = arith.constant 0 : index
      %30 = vector.load %arg3[%c0_11, %c0_12] : memref<1x1xf32, #tpu.memory_space<vmem>>, vector<1x1xf32>
      %cst_13 = arith.constant 6.250000e-02 : f32
      %31 = vector.broadcast %cst_13 : f32 to vector<1x1xf32>
      %32 = arith.mulf %30, %31 : vector<1x1xf32>
      %c0_14 = arith.constant 0 : index
      %c0_15 = arith.constant 0 : index
      %33 = vector.load %arg3[%c0_14, %c0_15] : memref<1x1xf32, #tpu.memory_space<vmem>>, vector<1x1xf32>
      tpu.vector_store %arg3[%c0_14, %c0_15], %32 {strides = array<i32>} : memref<1x1xf32, #tpu.memory_space<vmem>>, vector<1x1xf32>,
    } else {
    }
    return
  }
  func.func @transform_0(%arg0: i32) -> (i32, i32) {
    %c0_i32 = arith.constant 0 : i32
    %c0_i32_0 = arith.constant 0 : i32
    return %arg0, %c0_i32 : i32, i32
  }
  func.func @transform_1(%arg0: i32) -> (i32, i32) {
    %c0_i32 = arith.constant 0 : i32
    %c0_i32_0 = arith.constant 0 : i32
    return %arg0, %c0_i32 : i32, i32
  }
  func.func @transform_2(%arg0: i32) -> (i32, i32) {
    %c0_i32 = arith.constant 0 : i32
    %c0_i32_0 = arith.constant 0 : i32
    %c0_i32_1 = arith.constant 0 : i32
    return %c0_i32, %c0_i32_0 : i32, i32
  }
}

</mosaic_0001>

<llo_original>
// kernel: get_loss_forward.1
$region0: #{get_loss_forward.1}
  #allocation0 [shape = 'u32[]', space=smem, size = 0x4, offset = 0x4, fixed_abs, tag = 'smem constant byte address 0x4 - core index']
  #allocation1 [shape = 'u32[144,128]{1,0:T(1,128)}', space=vmem, size = 0x12000, scoped, tag = 'internal scratch']
  %s0 = inlined_call_operand.vmem [shape: f32[16,40], index: 0, kind: input, shape index: {}]
  %s1 = inlined_call_operand.vmem [shape: s32[16,1], index: 1, kind: input, shape index: {}]
  %s2 = inlined_call_operand.hbm [shape: f32[1,1], index: 2, kind: output, shape index: {}]
  %s3 = sld [smem:[#allocation0]]
  $region49: #{get_loss_forward.1} parent=0
    _
  %s5 = ssub.s32 1, %s3
  %s6 = scalar_select 0, %s5, %s3
  $region1: #{get_loss_forward.1} parent=0
    #allocation2 [shape = 'u8[512]{0}', space=vmem, size = 0x400, scoped, tag = 'output window, operand 0, single buffered']
    #allocation3 [shape = 's32[2]{0}', space=sflag, size = 0x8, scoped, tag = 'scoped memory for get_loss_forward.1']
    %7 = vsyncpa [#allocation3], 0
    loop: start=0, step=1, limit=4
    $region2: #{get_loss_forward.1} parent=1 // loop_pre_header
      _
    $region3: #{get_loss_forward.1} parent=1 // loop_header
      %s9 = sphi 0, %s13
      %p10 = scmp.ge.s32.totalorder %s9, 4
      %s19 = sphi 0, %s21
      %s22 = sphi 0, %s19
      %s23 = sphi 0, %s22
      %s39 = sphi 0, %s23
      %s45 = sphi 0, %s47
      %s48 = sphi 0, %s45
      %s49 = sphi 0, %s48
      %s65 = sphi 0, %s49
      %s69 = sphi 0, %s69
      %s71 = sphi 0, %s69
      %s72 = sphi 0, %s71
      %s86 = sphi 0, %s72
    $region4: #{get_loss_forward.1} parent=1 // loop_header_branch
      %12 = sbr.rel (%p10) target = $region8
    $region5: #{get_loss_forward.1} parent=1 // loop_body
      %s14 = ssub.s32 %s9, 1
      %s15 = ssub.s32 %s9, 2
      %s16 = sadd.s32 %s9, 1
      %s17 = ssub.s32 %s9, %s16
      %p18 = scmp.eq.s32.totalorder %s17, 0
      %s20 = sadd.s32 %s19, 1
      %s21 = scalar_select %p18, %s19, %s20
      %p24 = pneg %p18
      %p25 = scmp.eq.s32.totalorder %s9, 1
      %p26 = por %p24, %p25
      %p27 = scmp.ne.s32.totalorder %s19, %s22
      %p28 = scmp.eq.s32.totalorder %s9, 0
      %p29 = por %p27, %p28
      %p30 = scmp.ne.s32.totalorder %s19, %s22
      %p31 = scmp.eq.s32.totalorder %s14, 1
      %p32 = por %p30, %p31
      %p33 = scmp.ne.s32.totalorder %s22, %s23
      %p34 = scmp.eq.s32.totalorder %s14, 0
      %p35 = por %p33, %p34
      %p36 = scmp.ne.s32.totalorder %s22, %s23
      %p37 = scmp.eq.s32.totalorder %s15, 1
      %p38 = por %p36, %p37
      %p40 = scmp.ne.s32.totalorder %s23, %s39
      %p41 = scmp.eq.s32.totalorder %s15, 0
      %p42 = por %p40, %p41
      %s43 = ssub.s32 %s9, %s16
      %p44 = scmp.eq.s32.totalorder %s43, 0
      %s46 = sadd.s32 %s45, 1
      %s47 = scalar_select %p44, %s45, %s46
      %p50 = pneg %p44
      %p51 = scmp.eq.s32.totalorder %s9, 1
      %p52 = por %p50, %p51
      %p53 = scmp.ne.s32.totalorder %s45, %s48
      %p54 = scmp.eq.s32.totalorder %s9, 0
      %p55 = por %p53, %p54
      %p56 = scmp.ne.s32.totalorder %s45, %s48
      %p57 = scmp.eq.s32.totalorder %s14, 1
      %p58 = por %p56, %p57
      %p59 = scmp.ne.s32.totalorder %s48, %s49
      %p60 = scmp.eq.s32.totalorder %s14, 0
      %p61 = por %p59, %p60
      %p62 = scmp.ne.s32.totalorder %s48, %s49
      %p63 = scmp.eq.s32.totalorder %s15, 1
      %p64 = por %p62, %p63
      %p66 = scmp.ne.s32.totalorder %s49, %s65
      %p67 = scmp.eq.s32.totalorder %s15, 0
      %p68 = por %p66, %p67
      %s70 = sadd.s32 %s69, 1
      %p73 = scmp.eq.s32.totalorder %s9, 1
      %p74 = scmp.ne.s32.totalorder %s69, %s71
      %p75 = scmp.eq.s32.totalorder %s9, 0
      %p76 = por %p74, %p75
      %p77 = scmp.ne.s32.totalorder %s69, %s71
      %p78 = scmp.eq.s32.totalorder %s14, 1
      %p79 = por %p77, %p78
      %p80 = scmp.ne.s32.totalorder %s71, %s72
      %p81 = scmp.eq.s32.totalorder %s14, 0
      %p82 = por %p80, %p81
      %p83 = scmp.ne.s32.totalorder %s71, %s72
      %p84 = scmp.eq.s32.totalorder %s15, 1
      %p85 = por %p83, %p84
      %p87 = scmp.ne.s32.totalorder %s72, %s86
      %p88 = scmp.eq.s32.totalorder %s15, 0
      %p89 = por %p87, %p88
      %p90 = scmp.le.s32.totalorder 1, %s9
      %p91 = scmp.lt.s32.totalorder %s9, 3
      %p92 = pnand %p90, %p91
      %p93 = pneg %p92
      // Predicated region
      $region9: #{get_loss_forward.1} parent=5 // pred_check
        _
      $region10: #{get_loss_forward.1} parent=5 // pred_check_branch
        %95 = sbr.rel (%p92) target = $region12
      $region11: #{get_loss_forward.1} parent=5 // pred_region
        %s96 = ssub.s32 %s9, 1
      $region12: #{get_loss_forward.1} parent=5 // pred_fallthru
        _
      %p97 = scmp.lt.s32.totalorder %s9, 2
      // Predicated region
      $region13: #{get_loss_forward.1} parent=5 // pred_check
        %p98 = pneg %p97
      $region14: #{get_loss_forward.1} parent=5 // pred_check_branch
        %100 = sbr.rel (%p98) target = $region16
      $region15: #{get_loss_forward.1} parent=5 // pred_region
        // Predicated region
        $region17: #{get_loss_forward.1} parent=15 // pred_check
          %p101 = pneg %p29
        $region18: #{get_loss_forward.1} parent=15 // pred_check_branch
          %103 = sbr.rel (%p101) target = $region20
        $region19: #{get_loss_forward.1} parent=15 // pred_region
          %p104 = scmp.lt.s32.totalorder %s9, 1
          %s105 = scalar_select %p104, %s9, 1
          %s106 = smul.addr %s105, 8
          %s107 = scalar_lea.vmem %s0, %s106
        $region20: #{get_loss_forward.1} parent=15 // pred_fallthru
          _
        // Predicated region
        $region21: #{get_loss_forward.1} parent=15 // pred_check
          %p108 = pneg %p55
        $region22: #{get_loss_forward.1} parent=15 // pred_check_branch
          %110 = sbr.rel (%p108) target = $region24
        $region23: #{get_loss_forward.1} parent=15 // pred_region
          %p111 = scmp.lt.s32.totalorder %s9, 1
          %s112 = scalar_select %p111, %s9, 1
          %s113 = smul.addr %s112, 8
          %s114 = scalar_lea.vmem %s1, %s113
        $region24: #{get_loss_forward.1} parent=15 // pred_fallthru
          _
      $region16: #{get_loss_forward.1} parent=5 // pred_fallthru
        _
      %p115 = scmp.le.s32.totalorder 1, %s9
      %p116 = scmp.lt.s32.totalorder %s9, 3
      %p117 = pnand %p115, %p116
      %p118 = pneg %p117
      // Predicated region
      $region25: #{get_loss_forward.1} parent=5 // pred_check
        _
      $region26: #{get_loss_forward.1} parent=5 // pred_check_branch
        %120 = sbr.rel (%p117) target = $region28
      $region27: #{get_loss_forward.1} parent=5 // pred_region
        %s121 = ssub.s32 %s9, 1
        %p122 = scmp.lt.s32.totalorder %s14, 1
        %s123 = scalar_select %p122, %s14, 1
        %s124 = smul.addr %s123, 8
        %s125 = scalar_lea.vmem %s0, %s124
        %p126 = pneg %p35
        %p127 = pneg %p32
        %p128 = scmp.lt.s32.totalorder %s14, 1
        %s129 = scalar_select %p128, %s14, 1
        %s130 = smul.addr %s129, 8
        %s131 = scalar_lea.vmem %s1, %s130
        %p132 = pneg %p61
        %p133 = pneg %p58
        %p134 = pneg %p82
        %p135 = pneg %p79
        %p136 = scmp.lt.s32.totalorder %s14, 1
        %s137 = scalar_select %p136, %s14, 1
        %s138 = smul.addr %s137, 8
        %s139 = scalar_lea.vmem %s0, %s138
        %p140 = scmp.lt.s32.totalorder %s14, 1
        %s141 = scalar_select %p140, %s14, 1
        %s142 = smul.addr %s141, 8
        %s143 = scalar_lea.vmem %s1, %s142
        %p144 = scmp.eq.s32.totalorder %s14, 0
        // Predicated region
        $region29: #{get_loss_forward.1} parent=27 // pred_check
          %p145 = pneg %p144
        $region30: #{get_loss_forward.1} parent=27 // pred_check_branch
          %147 = sbr.rel (%p145) target = $region32
        $region31: #{get_loss_forward.1} parent=27 // pred_region
          %vm148 = vcmask 0
          %149 = vst.msk [vmem:[#allocation2] sm:$0x1] %vm148, 0.0
        $region32: #{get_loss_forward.1} parent=27 // pred_fallthru
          _
        %v150 = vld [vmem:[%s139] sm:$0xff]
        %v151 = vld [vmem:[%s143] sm:$0xff]
        %v152 = vlaneseq
        %v153 = vand.u32 %v152, 127
        %154 = vset.pattern.permute.xlu0 0
        %155 = vperm.xlu0 %154, %v151
        %v156 = vpop.permute.xlu0 %155
        %vm157 = vcmp.eq.s32.totalorder %v153, %v156
        %s158 = smul.u32 %s14, 8
        %v159 = vlaneseq
        %v160 = vshrl.u32 %v159, 7
        %v161 = vstv %s158
        %v162 = vadd.s32 %v161, %v160
        %vm163 = vcmp.lt.s32.totalorder %v162, 16
        %v164 = vsel %vm163, 1, 0
        %vm165 = vcmp.eq.s32.totalorder %v164, 1
        %vm166 = vmand %vm157, %vm165
        %v167 = vsel %vm166, %v150, 0.0
        %v168 = vld [vmem:[#allocation2] sm:$0x1]
        %vm169 = vcmask 326656
        %v170 = vsel %vm169, %v167, 0.0
        %171 = vadd.xlane.f32.xlu0 %v170
        %v172 = vpop.xlane.xlu0 %171
        %v173 = vrot.slane %v172, 4
        %v174 = vadd.f32 %v172, %v173
        %v175 = vrot.slane %v174, 2
        %v176 = vadd.f32 %v174, %v175
        %v177 = vrot.slane %v176, 1
        %v178 = vadd.f32 %v176, %v177
        %s179 = vtos %v178
        %s180 = ssub.f32 0.0, %s179
        %v181 = vstv %s180
        %v182 = vadd.f32 %v168, %v181
        %vm183 = vcmask 0
        %184 = vst.msk [vmem:[#allocation2] sm:$0x1] %vm183, %v182
        %p185 = scmp.eq.s32.totalorder %s14, 1
        // Predicated region
        $region33: #{get_loss_forward.1} parent=27 // pred_check
          %p186 = pneg %p185
        $region34: #{get_loss_forward.1} parent=27 // pred_check_branch
          %188 = sbr.rel (%p186) target = $region36
        $region35: #{get_loss_forward.1} parent=27 // pred_region
          %v189 = vld [vmem:[#allocation2] sm:$0x1]
          %v190 = vmul.f32 %v189, 0.0625
          %191 = vst.msk [vmem:[#allocation2] sm:$0x1] %vm183, %v190
        $region36: #{get_loss_forward.1} parent=27 // pred_fallthru
          _
        // Predicated region
        $region37: #{get_loss_forward.1} parent=27 // pred_check
          %p192 = pneg %p79
        $region38: #{get_loss_forward.1} parent=27 // pred_check_branch
          %194 = sbr.rel (%p192) target = $region40
        $region39: #{get_loss_forward.1} parent=27 // pred_region
          %s196 = ssub.s32 16, 16
          %197 = vsyncadd [#allocation3], %s196
          %s199 = sshll.u32 [#allocation2], 4
          %s200 = int_to_ptr.vmem [resolvable:$true] %s199
          %202 = dma.vmem_to_hbm [thread:$0]  %s200, 16, %s2, [#allocation3]
        $region40: #{get_loss_forward.1} parent=27 // pred_fallthru
          _
        // Predicated region
        $region41: #{get_loss_forward.1} parent=27 // pred_check
          %p203 = pneg %p79
        $region42: #{get_loss_forward.1} parent=27 // pred_check_branch
          %205 = sbr.rel (%p203) target = $region44
        $region43: #{get_loss_forward.1} parent=27 // pred_region
          %206 = dma.done [#allocation3], 16
        $region44: #{get_loss_forward.1} parent=27 // pred_fallthru
          _
      $region28: #{get_loss_forward.1} parent=5 // pred_fallthru
        _
      %p207 = scmp.le.s32.totalorder 2, %s9
      // Predicated region
      $region45: #{get_loss_forward.1} parent=5 // pred_check
        %p208 = pneg %p207
      $region46: #{get_loss_forward.1} parent=5 // pred_check_branch
        %210 = sbr.rel (%p208) target = $region48
      $region47: #{get_loss_forward.1} parent=5 // pred_region
        %s211 = ssub.s32 %s9, 2
      $region48: #{get_loss_forward.1} parent=5 // pred_fallthru
        _
    $region6: #{get_loss_forward.1} parent=1 // loop_footer
      %s13 = sadd.s32 1, %s9
    $region7: #{get_loss_forward.1} parent=1 // loop_footer_branch
      %8 = sbr.rel target = $region3
    $region8: #{get_loss_forward.1} parent=1 // loop_exit
      _
    %212 = vsyncpa [#allocation3], 1
    %s213 = scalar_lea.sflag [#allocation3], 1
    %214 = vsyncpa %s213, 1

</llo_original>
